<compile_context>
chip_gen: v5e
topology: v5e:2x2
jax: 0.10.0
libtpu: 0.0.40
codegen_flags: <defaults>
</compile_context>

<pallas_src>
import functools

import jax
import jax.numpy as jnp
from jax.experimental import pallas as pl
from jax.experimental.pallas import tpu as pltpu


def _round_up(x, m):
    return -(-x // m) * m


def _pad_dim(d):
    # Lane density needs a multiple of 128; prefer 256-alignment above 128 for
    # the 256-wide v6e/v7x MXU (v5e's 128-wide MXU is fine either way).
    return _round_up(d, 128) if d <= 128 else _round_up(d, 256)


def _hybrid_embed_kernel(x_ref, w1_ref, b1_ref, w2_ref, b2_ref, out_ref):
    # x_ref:   (TM, K1p)  flattened, zero-padded patches (one M tile)
    # w1_ref:  (K1p, Fp)  backbone patchify conv as matmul (resident)
    # b1_ref:  (1, Fp)    f32
    # w2_ref:  (Fp, Ep)   1x1 projection conv as matmul (resident)
    # b2_ref:  (1, Ep)    f32
    # out_ref: (TM, Ep)
    feat = jnp.dot(x_ref[...], w1_ref[...],
                   preferred_element_type=jnp.float32)
    # Bias + ReLU epilogue in f32, then drop back to the (bf16) compute dtype
    # so the inter-matmul intermediate costs half the vreg/VMEM/store traffic.
    feat = jnp.maximum(feat + b1_ref[...], 0.0).astype(w2_ref.dtype)
    out = jnp.dot(feat, w2_ref[...],
                  preferred_element_type=jnp.float32) + b2_ref[...]
    out_ref[...] = out.astype(out_ref.dtype)


def prepare_hybrid_embed_params(conv_w, conv_b, proj_w, proj_b,
                                *, compute_dtype=jnp.bfloat16):
    """One-time weight prep: reshape, transpose, zero-pad, cast.

    conv_w: (F, C, ph, pw)  backbone Conv2d weight (PyTorch layout)
    conv_b: (F,)
    proj_w: (E, F, 1, 1)    1x1 projection Conv2d weight
    proj_b: (E,)
    """
    F, C, ph, pw = conv_w.shape
    E = proj_w.shape[0]
    K1 = C * ph * pw
    K1p = _round_up(K1, 128)
    Fp = _pad_dim(F)
    Ep = _pad_dim(E)

    w1 = jnp.zeros((K1p, Fp), compute_dtype).at[:K1, :F].set(
        conv_w.reshape(F, K1).T.astype(compute_dtype))
    b1 = jnp.zeros((1, Fp), jnp.float32).at[:, :F].set(
        conv_b.astype(jnp.float32)[None, :])
    w2 = jnp.zeros((Fp, Ep), compute_dtype).at[:F, :E].set(
        proj_w.reshape(E, F).T.astype(compute_dtype))
    b2 = jnp.zeros((1, Ep), jnp.float32).at[:, :E].set(
        proj_b.astype(jnp.float32)[None, :])

    return dict(w1=w1, b1=b1, w2=w2, b2=b2,
                F=F, E=E, K1=K1, ph=ph, pw=pw)


def _choose_tm(M, tm):
    tm = max(16, (tm // 16) * 16)          # 16-aligned for bf16 sublane packing
    if M <= tm:
        return _round_up(M, 16)
    # Prefer a tile that divides M exactly (num_patches is usually highly
    # composite) so no padded rows are computed or written back.
    for cand in range(tm, 15, -16):
        if M % cand == 0:
            return cand
    return tm


def _make_call(Mp, TM, K1p, Fp, Ep, out_dtype, single_buffer_weights):
    # Resident (constant index_map) operands need only one VMEM buffer.
    w_kwargs = ({"pipeline_mode": pl.Buffered(1)}
                if single_buffer_weights else {})
    return pl.pallas_call(
        _hybrid_embed_kernel,
        out_shape=jax.ShapeDtypeStruct((Mp, Ep), out_dtype),
        grid=(Mp // TM,),
        in_specs=[
            pl.BlockSpec((TM, K1p), lambda i: (i, 0)),
            pl.BlockSpec((K1p, Fp), lambda i: (0, 0), **w_kwargs),
            pl.BlockSpec((1, Fp), lambda i: (0, 0), **w_kwargs),
            pl.BlockSpec((Fp, Ep), lambda i: (0, 0), **w_kwargs),
            pl.BlockSpec((1, Ep), lambda i: (0, 0), **w_kwargs),
        ],
        out_specs=pl.BlockSpec((TM, Ep), lambda i: (i, 0)),
        compiler_params=pltpu.CompilerParams(
            # Single parallel M axis: shards across v7x's two TensorCores.
            dimension_semantics=("parallel",),
            # v5e's ~16 MiB default scoped VMEM is the trap at real F/E;
            # 48 MiB stays safely under v7x's 64 MiB physical VMEM.
            vmem_limit_bytes=48 * 1024 * 1024,
        ),
    )


@functools.partial(
    jax.jit,
    static_argnames=("ph", "pw", "E", "K1", "tm", "out_dtype",
                     "single_buffer_weights"))
def _hybrid_embed_impl(x_nchw, w1, b1, w2, b2, *, ph, pw, E, K1, tm,
                       out_dtype, single_buffer_weights):
    B, C, H, W = x_nchw.shape
    assert H % ph == 0 and W % pw == 0, "image size must be patch-divisible"
    K1p, Fp = w1.shape
    Ep = w2.shape[1]
    Hf, Wf = H // ph, W // pw
    P = Hf * Wf
    M = B * P

    # Patch extraction in (C, kh, kw) order to match the Conv2d weight layout;
    # row-major (H, W) patch order matches .flatten(2).transpose(1, 2).
    # TODO(synk): folding this relayout into the kernel (NHWC input + in-VMEM
    # reshuffle driven by the index_map) would remove the remaining extra HBM
    # pass; here it stays a wrapper-side XLA op fused with the pad/cast below.
    patches = (x_nchw
               .reshape(B, C, Hf, ph, Wf, pw)
               .transpose(0, 2, 4, 1, 3, 5)
               .reshape(M, K1)
               .astype(w1.dtype))           # bf16 operands -> 2-4x MXU rate

    TM = _choose_tm(M, tm)
    Mp = _round_up(M, TM)
    pad_m, pad_k = Mp - M, K1p - K1
    if pad_m or pad_k:
        # jnp.pad fuses with the transpose/cast above under this jit (single
        # HBM preamble pass) instead of a separate zeros+scatter copy.
        patches = jnp.pad(patches, ((0, pad_m), (0, pad_k)))

    out_padded = _make_call(Mp, TM, K1p, Fp, Ep, out_dtype,
                            single_buffer_weights)(patches, w1, b1, w2, b2)
    return out_padded[:M, :E].reshape(B, P, E)


def hybrid_embed(x_nchw, params, *, tm=512, out_dtype=None):
    """x_nchw: (B, C, H, W).  Returns (B, num_patches, embed_dim).

    Pass out_dtype=jnp.bfloat16 if the downstream consumer runs in bf16 to
    halve the (M, E) writeback.
    """
    out_dtype = jnp.dtype(x_nchw.dtype if out_dtype is None else out_dtype)
    kwargs = dict(ph=params["ph"], pw=params["pw"], E=params["E"],
                  K1=params["K1"], tm=tm, out_dtype=out_dtype)
    args = (x_nchw, params["w1"], params["b1"], params["w2"], params["b2"])
    try:
        return _hybrid_embed_impl(*args, single_buffer_weights=True, **kwargs)
    except Exception:
        # Fallback if this jax build rejects pipeline_mode=pl.Buffered(1) on a
        # pallas_call BlockSpec; costs only doubled resident-weight VMEM.
        return _hybrid_embed_impl(*args, single_buffer_weights=False, **kwargs)


def hybrid_embed_ref(x_nchw, conv_w, conv_b, proj_w, proj_b):
    """Pure-JAX f32 reference mirroring the PyTorch forward."""
    B, C, H, W = x_nchw.shape
    F, _, ph, pw = conv_w.shape
    E = proj_w.shape[0]
    Hf, Wf = H // ph, W // pw
    P = Hf * Wf
    K1 = C * ph * pw
    patches = (x_nchw
               .reshape(B, C, Hf, ph, Wf, pw)
               .transpose(0, 2, 4, 1, 3, 5)
               .reshape(B, P, K1))
    feat = jnp.maximum(patches @ conv_w.reshape(F, K1).T + conv_b, 0.0)
    return feat @ proj_w.reshape(E, F).T + proj_b


if __name__ == "__main__":
    key = jax.random.PRNGKey(0)
    k_x, k_cw, k_cb, k_pw, k_pb = jax.random.split(key, 5)

    # Small shapes: batch=2, in_chans=4, img=16x16, patch=4 -> 4x4 feature map,
    # feature_dim=32, embed_dim=32, num_patches=16.
    B, C, H, W = 2, 4, 16, 16
    patch = 4
    feature_dim = 32
    embed_dim = 32

    x = jax.random.normal(k_x, (B, C, H, W), dtype=jnp.float32)
    conv_w = jax.random.normal(k_cw, (feature_dim, C, patch, patch),
                               dtype=jnp.float32) * 0.05
    conv_b = jax.random.normal(k_cb, (feature_dim,), dtype=jnp.float32) * 0.05
    proj_w = jax.random.normal(k_pw, (embed_dim, feature_dim, 1, 1),
                               dtype=jnp.float32) * 0.05
    proj_b = jax.random.normal(k_pb, (embed_dim,), dtype=jnp.float32) * 0.05

    ref = hybrid_embed_ref(x, conv_w, conv_b, proj_w, proj_b)

    # f32 path: exact check against the reference.
    params_f32 = prepare_hybrid_embed_params(conv_w, conv_b, proj_w, proj_b,
                                             compute_dtype=jnp.float32)
    out_f32 = jax.block_until_ready(hybrid_embed(x, params_f32))
    assert out_f32.shape == (B, (H // patch) * (W // patch), embed_dim), out_f32.shape
    assert jnp.allclose(out_f32, ref, atol=1e-4, rtol=1e-4), "f32 mismatch vs reference"

    # bf16 MXU path (default compute dtype): looser tolerance for bf16 operands.
    params_bf16 = prepare_hybrid_embed_params(conv_w, conv_b, proj_w, proj_b,
                                              compute_dtype=jnp.bfloat16)
    out_bf16 = jax.block_until_ready(hybrid_embed(x, params_bf16))
    assert out_bf16.shape == out_f32.shape
    assert jnp.allclose(out_bf16, ref, atol=3e-2, rtol=3e-2), "bf16 mismatch vs reference"

    print("KERNEL_OK")
</pallas_src>

<mosaic_0001>
module attributes {stable_mosaic.version = 11 : i64} {
  func.func @_hybrid_embed_kernel(%arg0: i32, %arg1: memref<32x128xf32, #tpu.memory_space<vmem>>, %arg2: memref<128x128xf32, #tpu.memory_space<vmem>>, %arg3: memref<1x128xf32, #tpu.memory_space<vmem>>, %arg4: memref<128x128xf32, #tpu.memory_space<vmem>>, %arg5: memref<1x128xf32, #tpu.memory_space<vmem>>, %arg6: memref<32x128xf32, #tpu.memory_space<vmem>>) attributes {dimension_semantics = [#tpu.dimension_semantics<parallel>], iteration_bounds = array<i64: 1>, scalar_prefetch = 0 : i64, scratch_operands = 0 : i64, tpu.core_type = #tpu.core_type<tc>, window_params = [{transform_indices = @transform_0, window_bounds = array<i64: 32, 128>}, {pipeline_mode = #tpu.pipeline_mode<synchronous>, transform_indices = @transform_1, window_bounds = array<i64: 128, 128>}, {pipeline_mode = #tpu.pipeline_mode<synchronous>, transform_indices = @transform_2, window_bounds = array<i64: 1, 128>}, {pipeline_mode = #tpu.pipeline_mode<synchronous>, transform_indices = @transform_3, window_bounds = array<i64: 128, 128>}, {pipeline_mode = #tpu.pipeline_mode<synchronous>, transform_indices = @transform_4, window_bounds = array<i64: 1, 128>}, {transform_indices = @transform_5, window_bounds = array<i64: 32, 128>}]} {
    %c0 = arith.constant 0 : index
    %c0_0 = arith.constant 0 : index
    %0 = vector.load %arg1[%c0, %c0_0] : memref<32x128xf32, #tpu.memory_space<vmem>>, vector<32x128xf32>
    %c0_1 = arith.constant 0 : index
    %c0_2 = arith.constant 0 : index
    %1 = vector.load %arg2[%c0_1, %c0_2] : memref<128x128xf32, #tpu.memory_space<vmem>>, vector<128x128xf32>
    %cst = arith.constant dense<0.000000e+00> : vector<32x128xf32>
    %2 = tpu.matmul %0, %1, %cst {dimension_numbers = #tpu.dot_dimension_numbers<[1], [0], [0], [1], [0, 0, 1, 1], [], []>} : vector<32x128xf32>, vector<128x128xf32>, vector<32x128xf32> -> vector<32x128xf32>
    %c0_3 = arith.constant 0 : index
    %c0_4 = arith.constant 0 : index
    %3 = vector.load %arg3[%c0_3, %c0_4] : memref<1x128xf32, #tpu.memory_space<vmem>>, vector<1x128xf32>
    %4 = vector.broadcast %3 : vector<1x128xf32> to vector<32x128xf32>
    %5 = arith.addf %2, %4 : vector<32x128xf32>
    %cst_5 = arith.constant 0.000000e+00 : f32
    %6 = vector.broadcast %cst_5 : f32 to vector<32x128xf32>
    %7 = arith.maximumf %5, %6 : vector<32x128xf32>
    %c0_6 = arith.constant 0 : index
    %c0_7 = arith.constant 0 : index
    %8 = vector.load %arg4[%c0_6, %c0_7] : memref<128x128xf32, #tpu.memory_space<vmem>>, vector<128x128xf32>
    %cst_8 = arith.constant dense<0.000000e+00> : vector<32x128xf32>
    %9 = tpu.matmul %7, %8, %cst_8 {dimension_numbers = #tpu.dot_dimension_numbers<[1], [0], [0], [1], [0, 0, 1, 1], [], []>} : vector<32x128xf32>, vector<128x128xf32>, vector<32x128xf32> -> vector<32x128xf32>
    %c0_9 = arith.constant 0 : index
    %c0_10 = arith.constant 0 : index
    %10 = vector.load %arg5[%c0_9, %c0_10] : memref<1x128xf32, #tpu.memory_space<vmem>>, vector<1x128xf32>
    %11 = vector.broadcast %10 : vector<1x128xf32> to vector<32x128xf32>
    %12 = arith.addf %9, %11 : vector<32x128xf32>
    %c0_11 = arith.constant 0 : index
    %c0_12 = arith.constant 0 : index
    %13 = vector.load %arg6[%c0_11, %c0_12] : memref<32x128xf32, #tpu.memory_space<vmem>>, vector<32x128xf32>
    tpu.vector_store %arg6[%c0_11, %c0_12], %12 {strides = array<i32>} : memref<32x128xf32, #tpu.memory_space<vmem>>, vector<32x128xf32>,
    return
  }
  func.func @transform_0(%arg0: i32) -> (i32, i32) {
    %c0_i32 = arith.constant 0 : i32
    %c0_i32_0 = arith.constant 0 : i32
    return %arg0, %c0_i32 : i32, i32
  }
  func.func @transform_1(%arg0: i32) -> (i32, i32) {
    %c0_i32 = arith.constant 0 : i32
    %c0_i32_0 = arith.constant 0 : i32
    %c0_i32_1 = arith.constant 0 : i32
    return %c0_i32, %c0_i32_0 : i32, i32
  }
  func.func @transform_2(%arg0: i32) -> (i32, i32) {
    %c0_i32 = arith.constant 0 : i32
    %c0_i32_0 = arith.constant 0 : i32
    %c0_i32_1 = arith.constant 0 : i32
    return %c0_i32, %c0_i32_0 : i32, i32
  }
  func.func @transform_3(%arg0: i32) -> (i32, i32) {
    %c0_i32 = arith.constant 0 : i32
    %c0_i32_0 = arith.constant 0 : i32
    %c0_i32_1 = arith.constant 0 : i32
    return %c0_i32, %c0_i32_0 : i32, i32
  }
  func.func @transform_4(%arg0: i32) -> (i32, i32) {
    %c0_i32 = arith.constant 0 : i32
    %c0_i32_0 = arith.constant 0 : i32
    %c0_i32_1 = arith.constant 0 : i32
    return %c0_i32, %c0_i32_0 : i32, i32
  }
  func.func @transform_5(%arg0: i32) -> (i32, i32) {
    %c0_i32 = arith.constant 0 : i32
    %c0_i32_0 = arith.constant 0 : i32
    return %arg0, %c0_i32 : i32, i32
  }
}

module attributes {stable_mosaic.version = 11 : i64} {
  func.func @_hybrid_embed_kernel(%arg0: i32, %arg1: memref<32x128xf32, #tpu.memory_space<vmem>>, %arg2: memref<128x128xf32, #tpu.memory_space<vmem>>, %arg3: memref<1x128xf32, #tpu.memory_space<vmem>>, %arg4: memref<128x128xf32, #tpu.memory_space<vmem>>, %arg5: memref<1x128xf32, #tpu.memory_space<vmem>>, %arg6: memref<32x128xf32, #tpu.memory_space<vmem>>) attributes {dimension_semantics = [#tpu.dimension_semantics<parallel>], iteration_bounds = array<i64: 1>, scalar_prefetch = 0 : i64, scratch_operands = 0 : i64, tpu.core_type = #tpu.core_type<tc>, window_params = [{transform_indices = @transform_0, window_bounds = array<i64: 32, 128>}, {pipeline_mode = #tpu.pipeline_mode<synchronous>, transform_indices = @transform_1, window_bounds = array<i64: 128, 128>}, {pipeline_mode = #tpu.pipeline_mode<synchronous>, transform_indices = @transform_2, window_bounds = array<i64: 1, 128>}, {pipeline_mode = #tpu.pipeline_mode<synchronous>, transform_indices = @transform_3, window_bounds = array<i64: 128, 128>}, {pipeline_mode = #tpu.pipeline_mode<synchronous>, transform_indices = @transform_4, window_bounds = array<i64: 1, 128>}, {transform_indices = @transform_5, window_bounds = array<i64: 32, 128>}]} {
    %c0 = arith.constant 0 : index
    %c0_0 = arith.constant 0 : index
    %0 = vector.load %arg1[%c0, %c0_0] : memref<32x128xf32, #tpu.memory_space<vmem>>, vector<32x128xf32>
    %c0_1 = arith.constant 0 : index
    %c0_2 = arith.constant 0 : index
    %1 = vector.load %arg2[%c0_1, %c0_2] : memref<128x128xf32, #tpu.memory_space<vmem>>, vector<128x128xf32>
    %cst = arith.constant dense<0.000000e+00> : vector<32x128xf32>
    %2 = tpu.matmul %0, %1, %cst {dimension_numbers = #tpu.dot_dimension_numbers<[1], [0], [0], [1], [0, 0, 1, 1], [], []>} : vector<32x128xf32>, vector<128x128xf32>, vector<32x128xf32> -> vector<32x128xf32>
    %c0_3 = arith.constant 0 : index
    %c0_4 = arith.constant 0 : index
    %3 = vector.load %arg3[%c0_3, %c0_4] : memref<1x128xf32, #tpu.memory_space<vmem>>, vector<1x128xf32>
    %4 = vector.broadcast %3 : vector<1x128xf32> to vector<32x128xf32>
    %5 = arith.addf %2, %4 : vector<32x128xf32>
    %cst_5 = arith.constant 0.000000e+00 : f32
    %6 = vector.broadcast %cst_5 : f32 to vector<32x128xf32>
    %7 = arith.maximumf %5, %6 : vector<32x128xf32>
    %c0_6 = arith.constant 0 : index
    %c0_7 = arith.constant 0 : index
    %8 = vector.load %arg4[%c0_6, %c0_7] : memref<128x128xf32, #tpu.memory_space<vmem>>, vector<128x128xf32>
    %cst_8 = arith.constant dense<0.000000e+00> : vector<32x128xf32>
    %9 = tpu.matmul %7, %8, %cst_8 {dimension_numbers = #tpu.dot_dimension_numbers<[1], [0], [0], [1], [0, 0, 1, 1], [], []>} : vector<32x128xf32>, vector<128x128xf32>, vector<32x128xf32> -> vector<32x128xf32>
    %c0_9 = arith.constant 0 : index
    %c0_10 = arith.constant 0 : index
    %10 = vector.load %arg5[%c0_9, %c0_10] : memref<1x128xf32, #tpu.memory_space<vmem>>, vector<1x128xf32>
    %11 = vector.broadcast %10 : vector<1x128xf32> to vector<32x128xf32>
    %12 = arith.addf %9, %11 : vector<32x128xf32>
    %c0_11 = arith.constant 0 : index
    %c0_12 = arith.constant 0 : index
    %13 = vector.load %arg6[%c0_11, %c0_12] : memref<32x128xf32, #tpu.memory_space<vmem>>, vector<32x128xf32>
    tpu.vector_store %arg6[%c0_11, %c0_12], %12 {strides = array<i32>} : memref<32x128xf32, #tpu.memory_space<vmem>>, vector<32x128xf32>,
    return
  }
  func.func @transform_0(%arg0: i32) -> (i32, i32) {
    %c0_i32 = arith.constant 0 : i32
    %c0_i32_0 = arith.constant 0 : i32
    return %arg0, %c0_i32 : i32, i32
  }
  func.func @transform_1(%arg0: i32) -> (i32, i32) {
    %c0_i32 = arith.constant 0 : i32
    %c0_i32_0 = arith.constant 0 : i32
    %c0_i32_1 = arith.constant 0 : i32
    return %c0_i32, %c0_i32_0 : i32, i32
  }
  func.func @transform_2(%arg0: i32) -> (i32, i32) {
    %c0_i32 = arith.constant 0 : i32
    %c0_i32_0 = arith.constant 0 : i32
    %c0_i32_1 = arith.constant 0 : i32
    return %c0_i32, %c0_i32_0 : i32, i32
  }
  func.func @transform_3(%arg0: i32) -> (i32, i32) {
    %c0_i32 = arith.constant 0 : i32
    %c0_i32_0 = arith.constant 0 : i32
    %c0_i32_1 = arith.constant 0 : i32
    return %c0_i32, %c0_i32_0 : i32, i32
  }
  func.func @transform_4(%arg0: i32) -> (i32, i32) {
    %c0_i32 = arith.constant 0 : i32
    %c0_i32_0 = arith.constant 0 : i32
    %c0_i32_1 = arith.constant 0 : i32
    return %c0_i32, %c0_i32_0 : i32, i32
  }
  func.func @transform_5(%arg0: i32) -> (i32, i32) {
    %c0_i32 = arith.constant 0 : i32
    %c0_i32_0 = arith.constant 0 : i32
    return %arg0, %c0_i32 : i32, i32
  }
}

</mosaic_0001>

<llo_original>
// kernel: _hybrid_embed_impl.1
$region0: #{_hybrid_embed_impl.1}
  #allocation0 [shape = 'u32[]', space=smem, size = 0x4, offset = 0x4, fixed_abs, tag = 'smem constant byte address 0x4 - core index']
  #allocation1 [shape = 'u32[72,128]{1,0:T(1,128)}', space=vmem, size = 0x9000, scoped, tag = 'internal scratch']
  %s0 = inlined_call_operand.vmem [shape: f32[32,128], index: 0, kind: input, shape index: {}]
  %s1 = inlined_call_operand.vmem [shape: f32[128,128], index: 1, kind: input, shape index: {}]
  %s2 = inlined_call_operand.vmem [shape: f32[1,128], index: 2, kind: input, shape index: {}]
  %s3 = inlined_call_operand.vmem [shape: f32[128,128], index: 3, kind: input, shape index: {}]
  %s4 = inlined_call_operand.vmem [shape: f32[1,128], index: 4, kind: input, shape index: {}]
  %s5 = inlined_call_operand.hbm [shape: f32[32,128], index: 5, kind: output, shape index: {}]
  %s6 = sld [smem:[#allocation0]]
  $region30: #{_hybrid_embed_impl.1} parent=0
    _
  %s8 = ssub.s32 1, %s6
  %s9 = scalar_select 0, %s8, %s6
  $region1: #{_hybrid_embed_impl.1} parent=0
    #allocation2 [shape = 'u8[16384]{0}', space=vmem, size = 0x4000, scoped, tag = 'output window, operand 0, single buffered']
    #allocation3 [shape = 's32[1]{0}', space=sflag, size = 0x4, scoped, tag = 'scoped memory for _hybrid_embed_impl.1']
    %10 = vsyncpa [#allocation3], 0
    // Predicated region
    $region2: #{_hybrid_embed_impl.1} parent=1 // pred_check
      _
    $region3: #{_hybrid_embed_impl.1} parent=1 // pred_check_branch
      %12 = sbr.rel (0) target = $region5
    $region4: #{_hybrid_embed_impl.1} parent=1 // pred_region
      _
    $region5: #{_hybrid_embed_impl.1} parent=1 // pred_fallthru
      _
    // Predicated region
    $region6: #{_hybrid_embed_impl.1} parent=1 // pred_check
      _
    $region7: #{_hybrid_embed_impl.1} parent=1 // pred_check_branch
      %14 = sbr.rel (0) target = $region9
    $region8: #{_hybrid_embed_impl.1} parent=1 // pred_region
      _
    $region9: #{_hybrid_embed_impl.1} parent=1 // pred_fallthru
      _
    // Predicated region
    $region10: #{_hybrid_embed_impl.1} parent=1 // pred_check
      _
    $region11: #{_hybrid_embed_impl.1} parent=1 // pred_check_branch
      %16 = sbr.rel (0) target = $region13
    $region12: #{_hybrid_embed_impl.1} parent=1 // pred_region
      _
    $region13: #{_hybrid_embed_impl.1} parent=1 // pred_fallthru
      _
    // Predicated region
    $region14: #{_hybrid_embed_impl.1} parent=1 // pred_check
      _
    $region15: #{_hybrid_embed_impl.1} parent=1 // pred_check_branch
      %18 = sbr.rel (0) target = $region17
    $region16: #{_hybrid_embed_impl.1} parent=1 // pred_region
      _
    $region17: #{_hybrid_embed_impl.1} parent=1 // pred_fallthru
      _
    // Predicated region
    $region18: #{_hybrid_embed_impl.1} parent=1 // pred_check
      _
    $region19: #{_hybrid_embed_impl.1} parent=1 // pred_check_branch
      %20 = sbr.rel (0) target = $region21
    $region20: #{_hybrid_embed_impl.1} parent=1 // pred_region
      _
    $region21: #{_hybrid_embed_impl.1} parent=1 // pred_fallthru
      _
    %v21 = vld [vmem:[%s0] sm:$0xff]
    %v22 = vld [vmem:[%s0 + $0x8] sm:$0xff]
    %v23 = vld [vmem:[%s0 + $0x10] sm:$0xff]
    %v24 = vld [vmem:[%s0 + $0x18] sm:$0xff]
    %v25 = vld [vmem:[%s1] sm:$0xff]
    %v26 = vld [vmem:[%s1 + $0x8] sm:$0xff]
    %v27 = vld [vmem:[%s1 + $0x10] sm:$0xff]
    %v28 = vld [vmem:[%s1 + $0x18] sm:$0xff]
    %v29 = vld [vmem:[%s1 + $0x20] sm:$0xff]
    %v30 = vld [vmem:[%s1 + $0x28] sm:$0xff]
    %v31 = vld [vmem:[%s1 + $0x30] sm:$0xff]
    %v32 = vld [vmem:[%s1 + $0x38] sm:$0xff]
    %v33 = vld [vmem:[%s1 + $0x40] sm:$0xff]
    %v34 = vld [vmem:[%s1 + $0x48] sm:$0xff]
    %v35 = vld [vmem:[%s1 + $0x50] sm:$0xff]
    %v36 = vld [vmem:[%s1 + $0x58] sm:$0xff]
    %v37 = vld [vmem:[%s1 + $0x60] sm:$0xff]
    %v38 = vld [vmem:[%s1 + $0x68] sm:$0xff]
    %v39 = vld [vmem:[%s1 + $0x70] sm:$0xff]
    %v40 = vld [vmem:[%s1 + $0x78] sm:$0xff]
    %v41 = vld [vmem:[%s2] sm:$0x1]
    %v43 = vperm.slane %v41, 0
    %45 = vmatpush.msra.mxu0 %v40
    %46 = vmatpush.msra.mxu0 %v39
    %47 = vmatpush.msra.mxu0 %v38
    %48 = vmatpush.msra.mxu0 %v37
    %49 = vmatpush.msra.mxu0 %v36
    %50 = vmatpush.msra.mxu0 %v35
    %51 = vmatpush.msra.mxu0 %v34
    %52 = vmatpush.msra.mxu0 %v33
    %53 = vmatpush.msra.mxu0 %v32
    %54 = vmatpush.msra.mxu0 %v31
    %55 = vmatpush.msra.mxu0 %v30
    %56 = vmatpush.msra.mxu0 %v29
    %57 = vmatpush.msra.mxu0 %v28
    %58 = vmatpush.msra.mxu0 %v27
    %59 = vmatpush.msra.mxu0 %v26
    %60 = vmatpush.msra.mxu0 %v25
    %61 = vmatmul.f32.gmra.mxu0 %v21
    %v62 = vpop.f32.mrf.mxu0
    %v63 = vadd.f32 %v43, %v62
    %64 = vmatmul.f32.gmra.mxu0 %v22
    %v65 = vpop.f32.mrf.mxu0
    %v66 = vadd.f32 %v43, %v65
    %67 = vmatmul.f32.gmra.mxu0 %v23
    %v68 = vpop.f32.mrf.mxu0
    %v69 = vadd.f32 %v43, %v68
    %70 = vmatmul.f32.gmra.mxu0 %v24
    %v71 = vpop.f32.mrf.mxu0
    %v72 = vadd.f32 %v43, %v71
    %73 = vdwg.mxu0
    %v74 = vmax.f32 %v63, 0.0
    %v75 = vmax.f32 %v66, 0.0
    %v76 = vmax.f32 %v69, 0.0
    %v77 = vmax.f32 %v72, 0.0
    %v78 = vld [vmem:[%s3] sm:$0xff]
    %v79 = vld [vmem:[%s3 + $0x8] sm:$0xff]
    %v80 = vld [vmem:[%s3 + $0x10] sm:$0xff]
    %v81 = vld [vmem:[%s3 + $0x18] sm:$0xff]
    %v82 = vld [vmem:[%s3 + $0x20] sm:$0xff]
    %v83 = vld [vmem:[%s3 + $0x28] sm:$0xff]
    %v84 = vld [vmem:[%s3 + $0x30] sm:$0xff]
    %v85 = vld [vmem:[%s3 + $0x38] sm:$0xff]
    %v86 = vld [vmem:[%s3 + $0x40] sm:$0xff]
    %v87 = vld [vmem:[%s3 + $0x48] sm:$0xff]
    %v88 = vld [vmem:[%s3 + $0x50] sm:$0xff]
    %v89 = vld [vmem:[%s3 + $0x58] sm:$0xff]
    %v90 = vld [vmem:[%s3 + $0x60] sm:$0xff]
    %v91 = vld [vmem:[%s3 + $0x68] sm:$0xff]
    %v92 = vld [vmem:[%s3 + $0x70] sm:$0xff]
    %v93 = vld [vmem:[%s3 + $0x78] sm:$0xff]
    %v94 = vld [vmem:[%s4] sm:$0x1]
    %v96 = vperm.slane %v94, 0
    %98 = vmatpush.msra.mxu0 %v93
    %99 = vmatpush.msra.mxu0 %v92
    %100 = vmatpush.msra.mxu0 %v91
    %101 = vmatpush.msra.mxu0 %v90
    %102 = vmatpush.msra.mxu0 %v89
    %103 = vmatpush.msra.mxu0 %v88
    %104 = vmatpush.msra.mxu0 %v87
    %105 = vmatpush.msra.mxu0 %v86
    %106 = vmatpush.msra.mxu0 %v85
    %107 = vmatpush.msra.mxu0 %v84
    %108 = vmatpush.msra.mxu0 %v83
    %109 = vmatpush.msra.mxu0 %v82
    %110 = vmatpush.msra.mxu0 %v81
    %111 = vmatpush.msra.mxu0 %v80
    %112 = vmatpush.msra.mxu0 %v79
    %113 = vmatpush.msra.mxu0 %v78
    %114 = vmatmul.f32.gmra.mxu0 %v74
    %v115 = vpop.f32.mrf.mxu0
    %v116 = vadd.f32 %v96, %v115
    %117 = vmatmul.f32.gmra.mxu0 %v75
    %v118 = vpop.f32.mrf.mxu0
    %v119 = vadd.f32 %v96, %v118
    %120 = vmatmul.f32.gmra.mxu0 %v76
    %v121 = vpop.f32.mrf.mxu0
    %v122 = vadd.f32 %v96, %v121
    %123 = vmatmul.f32.gmra.mxu0 %v77
    %v124 = vpop.f32.mrf.mxu0
    %v125 = vadd.f32 %v96, %v124
    %126 = vdwg.mxu0
    %127 = vst [vmem:[#allocation2] sm:$0xff] %v116
    %128 = vst [vmem:[#allocation2 + $0x8] sm:$0xff] %v119
    %129 = vst [vmem:[#allocation2 + $0x10] sm:$0xff] %v122
    %130 = vst [vmem:[#allocation2 + $0x18] sm:$0xff] %v125
    // Predicated region
    $region22: #{_hybrid_embed_impl.1} parent=1 // pred_check
      _
    $region23: #{_hybrid_embed_impl.1} parent=1 // pred_check_branch
      %132 = sbr.rel (0) target = $region25
    $region24: #{_hybrid_embed_impl.1} parent=1 // pred_region
      %134 = vsyncadd [#allocation3], 0
      %s135 = sshll.u32 [#allocation2], 4
      %s136 = int_to_ptr.vmem [resolvable:$true] %s135
      %s137 = sshll.u32 %s5, 4
      %s138 = int_to_ptr.hbm [resolvable:$true] %s137
      %143 = dma.vmem_to_hbm [thread:$0]  %s136, 512, %s138, [#allocation3], 128, 128, 8
    $region25: #{_hybrid_embed_impl.1} parent=1 // pred_fallthru
      _
    // Predicated region
    $region26: #{_hybrid_embed_impl.1} parent=1 // pred_check
      _
    $region27: #{_hybrid_embed_impl.1} parent=1 // pred_check_branch
      %145 = sbr.rel (0) target = $region29
    $region28: #{_hybrid_embed_impl.1} parent=1 // pred_region
      %147 = dma.done [#allocation3], 512
    $region29: #{_hybrid_embed_impl.1} parent=1 // pred_fallthru
      _
    %148 = vsyncpa [#allocation3], 1

// kernel: _hybrid_embed_impl.1
$region0: #{_hybrid_embed_impl.1}
  #allocation0 [shape = 'u32[]', space=smem, size = 0x4, offset = 0x4, fixed_abs, tag = 'smem constant byte address 0x4 - core index']
  #allocation1 [shape = 'u32[72,128]{1,0:T(1,128)}', space=vmem, size = 0x9000, scoped, tag = 'internal scratch']
  %s0 = inlined_call_operand.vmem [shape: f32[32,128], index: 0, kind: input, shape index: {}]
  %s1 = inlined_call_operand.vmem [shape: f32[128,128], index: 1, kind: input, shape index: {}]
  %s2 = inlined_call_operand.vmem [shape: f32[1,128], index: 2, kind: input, shape index: {}]
  %s3 = inlined_call_operand.vmem [shape: f32[128,128], index: 3, kind: input, shape index: {}]
  %s4 = inlined_call_operand.vmem [shape: f32[1,128], index: 4, kind: input, shape index: {}]
  %s5 = inlined_call_operand.hbm [shape: f32[32,128], index: 5, kind: output, shape index: {}]
  %s6 = sld [smem:[#allocation0]]
  $region30: #{_hybrid_embed_impl.1} parent=0
    _
  %s8 = ssub.s32 1, %s6
  %s9 = scalar_select 0, %s8, %s6
  $region1: #{_hybrid_embed_impl.1} parent=0
    #allocation2 [shape = 'u8[16384]{0}', space=vmem, size = 0x4000, scoped, tag = 'output window, operand 0, single buffered']
    #allocation3 [shape = 's32[1]{0}', space=sflag, size = 0x4, scoped, tag = 'scoped memory for _hybrid_embed_impl.1']
    %10 = vsyncpa [#allocation3], 0
    // Predicated region
    $region2: #{_hybrid_embed_impl.1} parent=1 // pred_check
      _
    $region3: #{_hybrid_embed_impl.1} parent=1 // pred_check_branch
      %12 = sbr.rel (0) target = $region5
    $region4: #{_hybrid_embed_impl.1} parent=1 // pred_region
      _
    $region5: #{_hybrid_embed_impl.1} parent=1 // pred_fallthru
      _
    // Predicated region
    $region6: #{_hybrid_embed_impl.1} parent=1 // pred_check
      _
    $region7: #{_hybrid_embed_impl.1} parent=1 // pred_check_branch
      %14 = sbr.rel (0) target = $region9
    $region8: #{_hybrid_embed_impl.1} parent=1 // pred_region
      _
    $region9: #{_hybrid_embed_impl.1} parent=1 // pred_fallthru
      _
    // Predicated region
    $region10: #{_hybrid_embed_impl.1} parent=1 // pred_check
      _
    $region11: #{_hybrid_embed_impl.1} parent=1 // pred_check_branch
      %16 = sbr.rel (0) target = $region13
    $region12: #{_hybrid_embed_impl.1} parent=1 // pred_region
      _
    $region13: #{_hybrid_embed_impl.1} parent=1 // pred_fallthru
      _
    // Predicated region
    $region14: #{_hybrid_embed_impl.1} parent=1 // pred_check
      _
    $region15: #{_hybrid_embed_impl.1} parent=1 // pred_check_branch
      %18 = sbr.rel (0) target = $region17
    $region16: #{_hybrid_embed_impl.1} parent=1 // pred_region
      _
    $region17: #{_hybrid_embed_impl.1} parent=1 // pred_fallthru
      _
    // Predicated region
    $region18: #{_hybrid_embed_impl.1} parent=1 // pred_check
      _
    $region19: #{_hybrid_embed_impl.1} parent=1 // pred_check_branch
      %20 = sbr.rel (0) target = $region21
    $region20: #{_hybrid_embed_impl.1} parent=1 // pred_region
      _
    $region21: #{_hybrid_embed_impl.1} parent=1 // pred_fallthru
      _
    %v21 = vld [vmem:[%s0] sm:$0xff]
    %v22 = vld [vmem:[%s0 + $0x8] sm:$0xff]
    %v23 = vld [vmem:[%s0 + $0x10] sm:$0xff]
    %v24 = vld [vmem:[%s0 + $0x18] sm:$0xff]
    %v25 = vld [vmem:[%s1] sm:$0xff]
    %v26 = vld [vmem:[%s1 + $0x8] sm:$0xff]
    %v27 = vld [vmem:[%s1 + $0x10] sm:$0xff]
    %v28 = vld [vmem:[%s1 + $0x18] sm:$0xff]
    %v29 = vld [vmem:[%s1 + $0x20] sm:$0xff]
    %v30 = vld [vmem:[%s1 + $0x28] sm:$0xff]
    %v31 = vld [vmem:[%s1 + $0x30] sm:$0xff]
    %v32 = vld [vmem:[%s1 + $0x38] sm:$0xff]
    %v33 = vld [vmem:[%s1 + $0x40] sm:$0xff]
    %v34 = vld [vmem:[%s1 + $0x48] sm:$0xff]
    %v35 = vld [vmem:[%s1 + $0x50] sm:$0xff]
    %v36 = vld [vmem:[%s1 + $0x58] sm:$0xff]
    %v37 = vld [vmem:[%s1 + $0x60] sm:$0xff]
    %v38 = vld [vmem:[%s1 + $0x68] sm:$0xff]
    %v39 = vld [vmem:[%s1 + $0x70] sm:$0xff]
    %v40 = vld [vmem:[%s1 + $0x78] sm:$0xff]
    %v41 = vld [vmem:[%s2] sm:$0x1]
    %v43 = vperm.slane %v41, 0
    %45 = vmatpush.msra.mxu0 %v40
    %46 = vmatpush.msra.mxu0 %v39
    %47 = vmatpush.msra.mxu0 %v38
    %48 = vmatpush.msra.mxu0 %v37
    %49 = vmatpush.msra.mxu0 %v36
    %50 = vmatpush.msra.mxu0 %v35
    %51 = vmatpush.msra.mxu0 %v34
    %52 = vmatpush.msra.mxu0 %v33
    %53 = vmatpush.msra.mxu0 %v32
    %54 = vmatpush.msra.mxu0 %v31
    %55 = vmatpush.msra.mxu0 %v30
    %56 = vmatpush.msra.mxu0 %v29
    %57 = vmatpush.msra.mxu0 %v28
    %58 = vmatpush.msra.mxu0 %v27
    %59 = vmatpush.msra.mxu0 %v26
    %60 = vmatpush.msra.mxu0 %v25
    %61 = vmatmul.f32.gmra.mxu0 %v21
    %v62 = vpop.f32.mrf.mxu0
    %v63 = vadd.f32 %v43, %v62
    %64 = vmatmul.f32.gmra.mxu0 %v22
    %v65 = vpop.f32.mrf.mxu0
    %v66 = vadd.f32 %v43, %v65
    %67 = vmatmul.f32.gmra.mxu0 %v23
    %v68 = vpop.f32.mrf.mxu0
    %v69 = vadd.f32 %v43, %v68
    %70 = vmatmul.f32.gmra.mxu0 %v24
    %v71 = vpop.f32.mrf.mxu0
    %v72 = vadd.f32 %v43, %v71
    %73 = vdwg.mxu0
    %v74 = vmax.f32 %v63, 0.0
    %v75 = vmax.f32 %v66, 0.0
    %v76 = vmax.f32 %v69, 0.0
    %v77 = vmax.f32 %v72, 0.0
    %v78 = vld [vmem:[%s3] sm:$0xff]
    %v79 = vld [vmem:[%s3 + $0x8] sm:$0xff]
    %v80 = vld [vmem:[%s3 + $0x10] sm:$0xff]
    %v81 = vld [vmem:[%s3 + $0x18] sm:$0xff]
    %v82 = vld [vmem:[%s3 + $0x20] sm:$0xff]
    %v83 = vld [vmem:[%s3 + $0x28] sm:$0xff]
    %v84 = vld [vmem:[%s3 + $0x30] sm:$0xff]
    %v85 = vld [vmem:[%s3 + $0x38] sm:$0xff]
    %v86 = vld [vmem:[%s3 + $0x40] sm:$0xff]
    %v87 = vld [vmem:[%s3 + $0x48] sm:$0xff]
    %v88 = vld [vmem:[%s3 + $0x50] sm:$0xff]
    %v89 = vld [vmem:[%s3 + $0x58] sm:$0xff]
    %v90 = vld [vmem:[%s3 + $0x60] sm:$0xff]
    %v91 = vld [vmem:[%s3 + $0x68] sm:$0xff]
    %v92 = vld [vmem:[%s3 + $0x70] sm:$0xff]
    %v93 = vld [vmem:[%s3 + $0x78] sm:$0xff]
    %v94 = vld [vmem:[%s4] sm:$0x1]
    %v96 = vperm.slane %v94, 0
    %98 = vmatpush.msra.mxu0 %v93
    %99 = vmatpush.msra.mxu0 %v92
    %100 = vmatpush.msra.mxu0 %v91
    %101 = vmatpush.msra.mxu0 %v90
    %102 = vmatpush.msra.mxu0 %v89
    %103 = vmatpush.msra.mxu0 %v88
    %104 = vmatpush.msra.mxu0 %v87
    %105 = vmatpush.msra.mxu0 %v86
    %106 = vmatpush.msra.mxu0 %v85
    %107 = vmatpush.msra.mxu0 %v84
    %108 = vmatpush.msra.mxu0 %v83
    %109 = vmatpush.msra.mxu0 %v82
    %110 = vmatpush.msra.mxu0 %v81
    %111 = vmatpush.msra.mxu0 %v80
    %112 = vmatpush.msra.mxu0 %v79
    %113 = vmatpush.msra.mxu0 %v78
    %114 = vmatmul.f32.gmra.mxu0 %v74
    %v115 = vpop.f32.mrf.mxu0
    %v116 = vadd.f32 %v96, %v115
    %117 = vmatmul.f32.gmra.mxu0 %v75
    %v118 = vpop.f32.mrf.mxu0
    %v119 = vadd.f32 %v96, %v118
    %120 = vmatmul.f32.gmra.mxu0 %v76
    %v121 = vpop.f32.mrf.mxu0
    %v122 = vadd.f32 %v96, %v121
    %123 = vmatmul.f32.gmra.mxu0 %v77
    %v124 = vpop.f32.mrf.mxu0
    %v125 = vadd.f32 %v96, %v124
    %126 = vdwg.mxu0
    %127 = vst [vmem:[#allocation2] sm:$0xff] %v116
    %128 = vst [vmem:[#allocation2 + $0x8] sm:$0xff] %v119
    %129 = vst [vmem:[#allocation2 + $0x10] sm:$0xff] %v122
    %130 = vst [vmem:[#allocation2 + $0x18] sm:$0xff] %v125
    // Predicated region
    $region22: #{_hybrid_embed_impl.1} parent=1 // pred_check
      _
    $region23: #{_hybrid_embed_impl.1} parent=1 // pred_check_branch
      %132 = sbr.rel (0) target = $region25
    $region24: #{_hybrid_embed_impl.1} parent=1 // pred_region
      %134 = vsyncadd [#allocation3], 0
      %s135 = sshll.u32 [#allocation2], 4
      %s136 = int_to_ptr.vmem [resolvable:$true] %s135
      %s137 = sshll.u32 %s5, 4
      %s138 = int_to_ptr.hbm [resolvable:$true] %s137
      %143 = dma.vmem_to_hbm [thread:$0]  %s136, 512, %s138, [#allocation3], 128, 128, 8
    $region25: #{_hybrid_embed_impl.1} parent=1 // pred_fallthru
      _
    // Predicated region
    $region26: #{_hybrid_embed_impl.1} parent=1 // pred_check
      _
    $region27: #{_hybrid_embed_impl.1} parent=1 // pred_check_branch
      %145 = sbr.rel (0) target = $region29
    $region28: #{_hybrid_embed_impl.1} parent=1 // pred_region
      %147 = dma.done [#allocation3], 512
    $region29: #{_hybrid_embed_impl.1} parent=1 // pred_fallthru
      _
    %148 = vsyncpa [#allocation3], 1

</llo_original>
